<compile_context>
chip_gen: v5e
topology: v5e:2x2
jax: 0.10.0
libtpu: 0.0.40
codegen_flags: <defaults>
</compile_context>

<pallas_src>
import jax
import jax.numpy as jnp
from jax import lax
from jax.experimental import pallas as pl
from jax.experimental.pallas import tpu as pltpu

LN_EPS = 1e-5  # nn.LayerNorm default


def _embed_kernel_norm(x_ref, w_ref, b_ref, gamma_ref, beta_ref, o_ref):
    """(tokens @ W + b) followed by LayerNorm(D), fused.

    x_ref:     (TN, K)  patch tokens, input dtype
    w_ref:     (K, D)   projection weight, input dtype (keeps MXU at bf16 rate)
    b_ref:     (1, D)   conv bias, f32
    gamma_ref: (1, D)   LayerNorm weight, f32
    beta_ref:  (1, D)   LayerNorm bias, f32
    o_ref:     (TN, D)
    """
    acc = jnp.dot(x_ref[...], w_ref[...], preferred_element_type=jnp.float32)
    y = acc + b_ref[...]

    # LayerNorm over D in f32 (biased variance, matching nn.LayerNorm).
    mean = jnp.mean(y, axis=-1, keepdims=True)
    yc = y - mean
    var = jnp.mean(yc * yc, axis=-1, keepdims=True)
    # Ragged-last-block rows may contain unspecified data; everything stays
    # row-wise and finite (rsqrt(var + eps)), and those rows are masked on
    # write — do not remove the +eps and do not add cross-row reductions.
    inv = lax.rsqrt(var + LN_EPS)
    out = yc * inv * gamma_ref[...] + beta_ref[...]
    o_ref[...] = out.astype(o_ref.dtype)


def _embed_kernel_nonorm(x_ref, w_ref, b_ref, o_ref):
    """(tokens @ W + b) only (norm_layer=None path)."""
    acc = jnp.dot(x_ref[...], w_ref[...], preferred_element_type=jnp.float32)
    o_ref[...] = (acc + b_ref[...]).astype(o_ref.dtype)


def patch_embed_2d(x, proj_weight, proj_bias, ln_gamma=None, ln_beta=None, *,
                   patch_size=4, tn=4096):
    """Forward pass of PatchEmbed2D.

    Args:
      x:           (B, C_in, H, W) NCHW input (what the PyTorch module takes).
      proj_weight: (D, C_in, p, p) Conv2d weight.
      proj_bias:   (D,)            Conv2d bias.
      ln_gamma:    (D,) LayerNorm weight, or None for norm_layer=None.
      ln_beta:     (D,) LayerNorm bias, or None.
      patch_size:  p.
      tn:          max token tile (rows per grid step); memory-bound kernel,
                   so big by default and auto-capped for small inputs.

    Returns:
      (B, H//p, W//p, D) channels-last, matching `proj(x).permute(0,2,3,1)`.
    """
    p = patch_size
    B, C, H, W = x.shape
    D = proj_weight.shape[0]
    Hp, Wp = H // p, W // p
    # Conv with kernel=stride=p drops trailing rows/cols that don't fill a patch.
    x = x[:, :, :Hp * p, :Wp * p]

    K = C * p * p
    N = B * Hp * Wp

    # im2col: one fused XLA transpose producing (N, K) tokens, patch flattened
    # in (c, i, j) order so the conv weight flattens with a plain reshape.
    # TODO(synk): fuse this into the kernel (see header note).
    tokens = (x.reshape(B, C, Hp, p, Wp, p)
               .transpose(0, 2, 4, 1, 3, 5)
               .reshape(N, K))

    # Parameter plumbing (tiny; hoist to param-load time in a real model).
    wk = proj_weight.reshape(D, K).T.astype(x.dtype)          # (K, D)
    b2 = proj_bias.reshape(1, D).astype(jnp.float32)

    # --- token tile selection (no padding; ragged last block is fine) ------
    # 16-aligned (covers f32 and bf16 sublane packing), at least 16.
    tn = max(16, (int(tn) // 16) * 16)
    # Cap so the grid keeps >= ~4 steps: the "parallel" axis then shards
    # across v7x's two TensorCores even for a single-image call, and the
    # pipeline has blocks to overlap; large-N calls keep the full tile.
    tn_quarter = ((pl.cdiv(N, 4) + 15) // 16) * 16
    tn = min(tn, max(16, tn_quarter))

    grid = (pl.cdiv(N, tn),)   # ragged last block; writes masked by Pallas

    x_spec = pl.BlockSpec((tn, K), lambda i: (i, 0))
    w_spec = pl.BlockSpec((K, D), lambda i: (0, 0))
    v_spec = pl.BlockSpec((1, D), lambda i: (0, 0))
    out_spec = pl.BlockSpec((tn, D), lambda i: (i, 0))

    if ln_gamma is not None:
        kernel = _embed_kernel_norm
        in_specs = [x_spec, w_spec, v_spec, v_spec, v_spec]
        args = (tokens, wk, b2,
                ln_gamma.reshape(1, D).astype(jnp.float32),
                ln_beta.reshape(1, D).astype(jnp.float32))
    else:
        kernel = _embed_kernel_nonorm
        in_specs = [x_spec, w_spec, v_spec]
        args = (tokens, wk, b2)

    out = pl.pallas_call(
        kernel,
        out_shape=jax.ShapeDtypeStruct((N, D), x.dtype),
        grid_spec=pltpu.PrefetchScalarGridSpec(
            num_scalar_prefetch=0,
            grid=grid,
            in_specs=in_specs,
            out_specs=out_spec,
        ),
        compiler_params=pltpu.CompilerParams(
            dimension_semantics=("parallel",),
            # Headroom for tn up to 4096 f32 blocks (double-buffered) plus the
            # compiler's f32 LayerNorm intermediates; bumps v5e's 16 MiB
            # default, matches v6e/v7x defaults, < every physical limit.
            vmem_limit_bytes=32 * 1024 * 1024,
        ),
    )(*args)

    # (N, D) -> (B, Hp, Wp, D) is a free, contiguous metadata reshape.
    return out.reshape(B, Hp, Wp, D)


def _reference(x, proj_weight, proj_bias, ln_gamma, ln_beta, *, patch_size=4):
    """Pure-JAX reference mirroring the PyTorch forward."""
    p = patch_size
    out = lax.conv_general_dilated(
        x.astype(jnp.float32), proj_weight.astype(jnp.float32),
        window_strides=(p, p), padding="VALID",
        dimension_numbers=("NCHW", "OIHW", "NCHW"),
        precision=lax.Precision.HIGHEST)
    out = out + proj_bias.astype(jnp.float32).reshape(1, -1, 1, 1)
    out = out.transpose(0, 2, 3, 1)                            # NHWC
    if ln_gamma is not None:
        mean = jnp.mean(out, axis=-1, keepdims=True)
        var = jnp.mean((out - mean) ** 2, axis=-1, keepdims=True)
        out = (out - mean) * lax.rsqrt(var + LN_EPS) * ln_gamma + ln_beta
    return out


if __name__ == "__main__":
    key = jax.random.PRNGKey(0)
    k_x, k_w, k_b, k_g, k_bt, k_x2 = jax.random.split(key, 6)

    # Module defaults: patch_size=4, in_chans=3, embed_dim=96.
    # VM-UNet builds it with norm_layer=nn.LayerNorm (patch_norm=True).
    B, C, D, P = 2, 3, 96, 4
    proj_w = 0.1 * jax.random.normal(k_w, (D, C, P, P), dtype=jnp.float32)
    proj_b = 0.1 * jax.random.normal(k_b, (D,), dtype=jnp.float32)
    gamma = 1.0 + 0.1 * jax.random.normal(k_g, (D,), dtype=jnp.float32)
    beta = 0.1 * jax.random.normal(k_bt, (D,), dtype=jnp.float32)

    # Case 1: divisible spatial size (16x16), with LayerNorm (VM-UNet config)
    # and without (module default norm_layer=None).
    H = W = 16
    x = jax.random.normal(k_x, (B, C, H, W), dtype=jnp.float32)

    out = jax.block_until_ready(
        patch_embed_2d(x, proj_w, proj_b, gamma, beta, patch_size=P))
    ref = _reference(x, proj_w, proj_b, gamma, beta, patch_size=P)
    assert out.shape == (B, H // P, W // P, D), out.shape
    err = float(jnp.max(jnp.abs(out - ref)))
    assert err < 5e-3, err

    out2 = jax.block_until_ready(
        patch_embed_2d(x, proj_w, proj_b, None, None, patch_size=P))
    ref2 = _reference(x, proj_w, proj_b, None, None, patch_size=P)
    err2 = float(jnp.max(jnp.abs(out2 - ref2)))
    assert err2 < 5e-3, err2

    # Case 2: non-divisible spatial size (21x21 -> crop to 20x20) so that
    # N = 2*5*5 = 50 is NOT a multiple of the 16-aligned tile — exercises the
    # ragged last block / masked write path.
    H2 = W2 = 21
    x2 = jax.random.normal(k_x2, (B, C, H2, W2), dtype=jnp.float32)
    out3 = jax.block_until_ready(
        patch_embed_2d(x2, proj_w, proj_b, gamma, beta, patch_size=P))
    ref3 = _reference(x2[:, :, :20, :20], proj_w, proj_b, gamma, beta,
                      patch_size=P)
    assert out3.shape == (B, H2 // P, W2 // P, D), out3.shape
    err3 = float(jnp.max(jnp.abs(out3 - ref3)))
    assert err3 < 5e-3, err3

    print("KERNEL_OK")
</pallas_src>

<mosaic_0001>
module attributes {stable_mosaic.version = 11 : i64} {
  func.func @_embed_kernel_norm(%arg0: i32, %arg1: memref<16x48xf32, #tpu.memory_space<vmem>>, %arg2: memref<48x96xf32, #tpu.memory_space<vmem>>, %arg3: memref<1x96xf32, #tpu.memory_space<vmem>>, %arg4: memref<1x96xf32, #tpu.memory_space<vmem>>, %arg5: memref<1x96xf32, #tpu.memory_space<vmem>>, %arg6: memref<16x96xf32, #tpu.memory_space<vmem>>) attributes {dimension_semantics = [#tpu.dimension_semantics<parallel>], iteration_bounds = array<i64: 2>, scalar_prefetch = 0 : i64, scratch_operands = 0 : i64, tpu.core_type = #tpu.core_type<tc>, window_params = [{transform_indices = @transform_0, window_bounds = array<i64: 16, 48>}, {pipeline_mode = #tpu.pipeline_mode<synchronous>, transform_indices = @transform_1, window_bounds = array<i64: 48, 96>}, {pipeline_mode = #tpu.pipeline_mode<synchronous>, transform_indices = @transform_2, window_bounds = array<i64: 1, 96>}, {pipeline_mode = #tpu.pipeline_mode<synchronous>, transform_indices = @transform_3, window_bounds = array<i64: 1, 96>}, {pipeline_mode = #tpu.pipeline_mode<synchronous>, transform_indices = @transform_4, window_bounds = array<i64: 1, 96>}, {transform_indices = @transform_5, window_bounds = array<i64: 16, 96>}]} {
    %c0 = arith.constant 0 : index
    %c0_0 = arith.constant 0 : index
    %0 = vector.load %arg1[%c0, %c0_0] : memref<16x48xf32, #tpu.memory_space<vmem>>, vector<16x48xf32>
    %c0_1 = arith.constant 0 : index
    %c0_2 = arith.constant 0 : index
    %1 = vector.load %arg2[%c0_1, %c0_2] : memref<48x96xf32, #tpu.memory_space<vmem>>, vector<48x96xf32>
    %cst = arith.constant dense<0.000000e+00> : vector<16x96xf32>
    %2 = tpu.matmul %0, %1, %cst {dimension_numbers = #tpu.dot_dimension_numbers<[1], [0], [0], [1], [0, 0, 1, 1], [], []>} : vector<16x48xf32>, vector<48x96xf32>, vector<16x96xf32> -> vector<16x96xf32>
    %c0_3 = arith.constant 0 : index
    %c0_4 = arith.constant 0 : index
    %3 = vector.load %arg3[%c0_3, %c0_4] : memref<1x96xf32, #tpu.memory_space<vmem>>, vector<1x96xf32>
    %4 = vector.broadcast %3 : vector<1x96xf32> to vector<16x96xf32>
    %5 = arith.addf %2, %4 : vector<16x96xf32>
    %cst_5 = arith.constant dense<0.000000e+00> : vector<16xf32>
    %6 = vector.multi_reduction <add>, %5, %cst_5 [1] : vector<16x96xf32> to vector<16xf32>
    %7 = vector.shape_cast %6 : vector<16xf32> to vector<16x1xf32>
    %cst_6 = arith.constant 9.600000e+01 : f32
    %8 = vector.broadcast %cst_6 : f32 to vector<16x1xf32>
    %9 = arith.divf %7, %8 : vector<16x1xf32>
    %10 = vector.broadcast %9 : vector<16x1xf32> to vector<16x96xf32>
    %11 = arith.subf %5, %10 : vector<16x96xf32>
    %12 = arith.mulf %11, %11 : vector<16x96xf32>
    %cst_7 = arith.constant dense<0.000000e+00> : vector<16xf32>
    %13 = vector.multi_reduction <add>, %12, %cst_7 [1] : vector<16x96xf32> to vector<16xf32>
    %14 = vector.shape_cast %13 : vector<16xf32> to vector<16x1xf32>
    %cst_8 = arith.constant 9.600000e+01 : f32
    %15 = vector.broadcast %cst_8 : f32 to vector<16x1xf32>
    %16 = arith.divf %14, %15 : vector<16x1xf32>
    %cst_9 = arith.constant 9.99999974E-6 : f32
    %17 = vector.broadcast %cst_9 : f32 to vector<16x1xf32>
    %18 = arith.addf %16, %17 : vector<16x1xf32>
    %19 = math.rsqrt %18 : vector<16x1xf32>
    %20 = vector.broadcast %19 : vector<16x1xf32> to vector<16x96xf32>
    %21 = arith.mulf %11, %20 : vector<16x96xf32>
    %c0_10 = arith.constant 0 : index
    %c0_11 = arith.constant 0 : index
    %22 = vector.load %arg4[%c0_10, %c0_11] : memref<1x96xf32, #tpu.memory_space<vmem>>, vector<1x96xf32>
    %23 = vector.broadcast %22 : vector<1x96xf32> to vector<16x96xf32>
    %24 = arith.mulf %21, %23 : vector<16x96xf32>
    %c0_12 = arith.constant 0 : index
    %c0_13 = arith.constant 0 : index
    %25 = vector.load %arg5[%c0_12, %c0_13] : memref<1x96xf32, #tpu.memory_space<vmem>>, vector<1x96xf32>
    %26 = vector.broadcast %25 : vector<1x96xf32> to vector<16x96xf32>
    %27 = arith.addf %24, %26 : vector<16x96xf32>
    %c0_14 = arith.constant 0 : index
    %c0_15 = arith.constant 0 : index
    %28 = vector.load %arg6[%c0_14, %c0_15] : memref<16x96xf32, #tpu.memory_space<vmem>>, vector<16x96xf32>
    tpu.vector_store %arg6[%c0_14, %c0_15], %27 {strides = array<i32>} : memref<16x96xf32, #tpu.memory_space<vmem>>, vector<16x96xf32>,
    return
  }
  func.func @transform_0(%arg0: i32) -> (i32, i32) {
    %c0_i32 = arith.constant 0 : i32
    %c0_i32_0 = arith.constant 0 : i32
    return %arg0, %c0_i32 : i32, i32
  }
  func.func @transform_1(%arg0: i32) -> (i32, i32) {
    %c0_i32 = arith.constant 0 : i32
    %c0_i32_0 = arith.constant 0 : i32
    %c0_i32_1 = arith.constant 0 : i32
    return %c0_i32, %c0_i32_0 : i32, i32
  }
  func.func @transform_2(%arg0: i32) -> (i32, i32) {
    %c0_i32 = arith.constant 0 : i32
    %c0_i32_0 = arith.constant 0 : i32
    %c0_i32_1 = arith.constant 0 : i32
    return %c0_i32, %c0_i32_0 : i32, i32
  }
  func.func @transform_3(%arg0: i32) -> (i32, i32) {
    %c0_i32 = arith.constant 0 : i32
    %c0_i32_0 = arith.constant 0 : i32
    %c0_i32_1 = arith.constant 0 : i32
    return %c0_i32, %c0_i32_0 : i32, i32
  }
  func.func @transform_4(%arg0: i32) -> (i32, i32) {
    %c0_i32 = arith.constant 0 : i32
    %c0_i32_0 = arith.constant 0 : i32
    %c0_i32_1 = arith.constant 0 : i32
    return %c0_i32, %c0_i32_0 : i32, i32
  }
  func.func @transform_5(%arg0: i32) -> (i32, i32) {
    %c0_i32 = arith.constant 0 : i32
    %c0_i32_0 = arith.constant 0 : i32
    return %arg0, %c0_i32 : i32, i32
  }
}

</mosaic_0001>

<llo_original>
// kernel: tpu_custom_call.1
$region0: #{tpu_custom_call.1}
  #allocation0 [shape = 'u32[]', space=smem, size = 0x4, offset = 0x4, fixed_abs, tag = 'smem constant byte address 0x4 - core index']
  #allocation1 [shape = 'u32[72,128]{1,0:T(1,128)}', space=vmem, size = 0x9000, scoped, tag = 'internal scratch']
  %s0 = inlined_call_operand.hbm [shape: f32[32,48], index: 0, kind: input, shape index: {}]
  %s1 = inlined_call_operand.hbm [shape: f32[48,96], index: 1, kind: input, shape index: {}]
  %s2 = inlined_call_operand.vmem [shape: f32[1,96], index: 2, kind: input, shape index: {}]
  %s3 = inlined_call_operand.vmem [shape: f32[1,96], index: 3, kind: input, shape index: {}]
  %s4 = inlined_call_operand.vmem [shape: f32[1,96], index: 4, kind: input, shape index: {}]
  %s5 = inlined_call_operand.hbm [shape: f32[32,96], index: 5, kind: output, shape index: {}]
  %s6 = sld [smem:[#allocation0]]
  $region61: #{tpu_custom_call.1} parent=0
    _
  %s8 = ssub.s32 1, %s6
  %s9 = scalar_select 0, %s8, %s6
  $region1: #{tpu_custom_call.1} parent=0
    #allocation2 [shape = 'u8[16384]{0}', space=vmem, size = 0x4000, scoped, tag = 'input window, operand 0']
    #allocation3 [shape = 's32[2]{0}', space=sflag, size = 0x8, scoped, tag = 'scoped memory for tpu_custom_call.1']
    #allocation4 [shape = 's32[2]{0}', space=sflag, size = 0x8, scoped, tag = 'scoped memory for tpu_custom_call.1']
    #allocation5 [shape = 'u8[24576]{0}', space=vmem, size = 0x6000, scoped, tag = 'input window, operand 1, single buffered']
    #allocation6 [shape = 's32[1]{0}', space=sflag, size = 0x4, scoped, tag = 'scoped memory for tpu_custom_call.1']
    #allocation7 [shape = 'u8[16384]{0}', space=vmem, size = 0x4000, scoped, tag = 'output window, operand 0']
    %10 = vsyncpa [#allocation3], 0
    %s11 = scalar_lea.sflag [#allocation3], 1
    %12 = vsyncpa %s11, 0
    %13 = vsyncpa [#allocation6], 0
    %14 = vsyncpa [#allocation4], 0
    %s15 = scalar_lea.sflag [#allocation4], 1
    %16 = vsyncpa %s15, 0
    loop: start=0, step=1, limit=4
    $region2: #{tpu_custom_call.1} parent=1 // loop_pre_header
      _
    $region3: #{tpu_custom_call.1} parent=1 // loop_header
      %s18 = sphi 0, %s22
      %p19 = scmp.ge.s32.totalorder %s18, 4
      %s28 = sphi 0, %s30
      %s31 = sphi 0, %s28
      %s32 = sphi 0, %s31
      %s48 = sphi 0, %s32
      %s52 = sphi 0, %s52
      %s54 = sphi 0, %s52
      %s55 = sphi 0, %s54
      %s69 = sphi 0, %s55
      %s73 = sphi 0, %s73
      %s75 = sphi 0, %s73
      %s76 = sphi 0, %s75
      %s90 = sphi 0, %s76
      %s94 = sphi 0, %s94
      %s96 = sphi 0, %s94
      %s97 = sphi 0, %s96
      %s111 = sphi 0, %s97
      %s115 = sphi 0, %s115
      %s117 = sphi 0, %s115
      %s118 = sphi 0, %s117
      %s132 = sphi 0, %s118
      %s138 = sphi 0, %s140
      %s141 = sphi 0, %s138
      %s142 = sphi 0, %s141
      %s158 = sphi 0, %s142
    $region4: #{tpu_custom_call.1} parent=1 // loop_header_branch
      %21 = sbr.rel (%p19) target = $region8
    $region5: #{tpu_custom_call.1} parent=1 // loop_body
      %s23 = ssub.s32 %s18, 1
      %s24 = ssub.s32 %s18, 2
      %s25 = sadd.s32 %s18, 1
      %s26 = ssub.s32 %s18, %s25
      %p27 = scmp.eq.s32.totalorder %s26, 0
      %s29 = sadd.s32 %s28, 1
      %s30 = scalar_select %p27, %s28, %s29
      %p33 = pneg %p27
      %p34 = scmp.eq.s32.totalorder %s18, 1
      %p35 = por %p33, %p34
      %p36 = scmp.ne.s32.totalorder %s28, %s31
      %p37 = scmp.eq.s32.totalorder %s18, 0
      %p38 = por %p36, %p37
      %p39 = scmp.ne.s32.totalorder %s28, %s31
      %p40 = scmp.eq.s32.totalorder %s23, 1
      %p41 = por %p39, %p40
      %p42 = scmp.ne.s32.totalorder %s31, %s32
      %p43 = scmp.eq.s32.totalorder %s23, 0
      %p44 = por %p42, %p43
      %p45 = scmp.ne.s32.totalorder %s31, %s32
      %p46 = scmp.eq.s32.totalorder %s24, 1
      %p47 = por %p45, %p46
      %p49 = scmp.ne.s32.totalorder %s32, %s48
      %p50 = scmp.eq.s32.totalorder %s24, 0
      %p51 = por %p49, %p50
      %s53 = sadd.s32 %s52, 1
      %p56 = scmp.eq.s32.totalorder %s18, 1
      %p57 = scmp.ne.s32.totalorder %s52, %s54
      %p58 = scmp.eq.s32.totalorder %s18, 0
      %p59 = por %p57, %p58
      %p60 = scmp.ne.s32.totalorder %s52, %s54
      %p61 = scmp.eq.s32.totalorder %s23, 1
      %p62 = por %p60, %p61
      %p63 = scmp.ne.s32.totalorder %s54, %s55
      %p64 = scmp.eq.s32.totalorder %s23, 0
      %p65 = por %p63, %p64
      %p66 = scmp.ne.s32.totalorder %s54, %s55
      %p67 = scmp.eq.s32.totalorder %s24, 1
      %p68 = por %p66, %p67
      %p70 = scmp.ne.s32.totalorder %s55, %s69
      %p71 = scmp.eq.s32.totalorder %s24, 0
      %p72 = por %p70, %p71
      %s74 = sadd.s32 %s73, 1
      %p77 = scmp.eq.s32.totalorder %s18, 1
      %p78 = scmp.ne.s32.totalorder %s73, %s75
      %p79 = scmp.eq.s32.totalorder %s18, 0
      %p80 = por %p78, %p79
      %p81 = scmp.ne.s32.totalorder %s73, %s75
      %p82 = scmp.eq.s32.totalorder %s23, 1
      %p83 = por %p81, %p82
      %p84 = scmp.ne.s32.totalorder %s75, %s76
      %p85 = scmp.eq.s32.totalorder %s23, 0
      %p86 = por %p84, %p85
      %p87 = scmp.ne.s32.totalorder %s75, %s76
      %p88 = scmp.eq.s32.totalorder %s24, 1
      %p89 = por %p87, %p88
      %p91 = scmp.ne.s32.totalorder %s76, %s90
      %p92 = scmp.eq.s32.totalorder %s24, 0
      %p93 = por %p91, %p92
      %s95 = sadd.s32 %s94, 1
      %p98 = scmp.eq.s32.totalorder %s18, 1
      %p99 = scmp.ne.s32.totalorder %s94, %s96
      %p100 = scmp.eq.s32.totalorder %s18, 0
      %p101 = por %p99, %p100
      %p102 = scmp.ne.s32.totalorder %s94, %s96
      %p103 = scmp.eq.s32.totalorder %s23, 1
      %p104 = por %p102, %p103
      %p105 = scmp.ne.s32.totalorder %s96, %s97
      %p106 = scmp.eq.s32.totalorder %s23, 0
      %p107 = por %p105, %p106
      %p108 = scmp.ne.s32.totalorder %s96, %s97
      %p109 = scmp.eq.s32.totalorder %s24, 1
      %p110 = por %p108, %p109
      %p112 = scmp.ne.s32.totalorder %s97, %s111
      %p113 = scmp.eq.s32.totalorder %s24, 0
      %p114 = por %p112, %p113
      %s116 = sadd.s32 %s115, 1
      %p119 = scmp.eq.s32.totalorder %s18, 1
      %p120 = scmp.ne.s32.totalorder %s115, %s117
      %p121 = scmp.eq.s32.totalorder %s18, 0
      %p122 = por %p120, %p121
      %p123 = scmp.ne.s32.totalorder %s115, %s117
      %p124 = scmp.eq.s32.totalorder %s23, 1
      %p125 = por %p123, %p124
      %p126 = scmp.ne.s32.totalorder %s117, %s118
      %p127 = scmp.eq.s32.totalorder %s23, 0
      %p128 = por %p126, %p127
      %p129 = scmp.ne.s32.totalorder %s117, %s118
      %p130 = scmp.eq.s32.totalorder %s24, 1
      %p131 = por %p129, %p130
      %p133 = scmp.ne.s32.totalorder %s118, %s132
      %p134 = scmp.eq.s32.totalorder %s24, 0
      %p135 = por %p133, %p134
      %s136 = ssub.s32 %s18, %s25
      %p137 = scmp.eq.s32.totalorder %s136, 0
      %s139 = sadd.s32 %s138, 1
      %s140 = scalar_select %p137, %s138, %s139
      %p143 = pneg %p137
      %p144 = scmp.eq.s32.totalorder %s18, 1
      %p145 = por %p143, %p144
      %p146 = scmp.ne.s32.totalorder %s138, %s141
      %p147 = scmp.eq.s32.totalorder %s18, 0
      %p148 = por %p146, %p147
      %p149 = scmp.ne.s32.totalorder %s138, %s141
      %p150 = scmp.eq.s32.totalorder %s23, 1
      %p151 = por %p149, %p150
      %p152 = scmp.ne.s32.totalorder %s141, %s142
      %p153 = scmp.eq.s32.totalorder %s23, 0
      %p154 = por %p152, %p153
      %p155 = scmp.ne.s32.totalorder %s141, %s142
      %p156 = scmp.eq.s32.totalorder %s24, 1
      %p157 = por %p155, %p156
      %p159 = scmp.ne.s32.totalorder %s142, %s158
      %p160 = scmp.eq.s32.totalorder %s24, 0
      %p161 = por %p159, %p160
      %p162 = scmp.le.s32.totalorder 1, %s18
      %p163 = scmp.lt.s32.totalorder %s18, 3
      %p164 = pnand %p162, %p163
      %p165 = pneg %p164
      // Predicated region
      $region9: #{tpu_custom_call.1} parent=5 // pred_check
        _
      $region10: #{tpu_custom_call.1} parent=5 // pred_check_branch
        %167 = sbr.rel (%p164) target = $region12
      $region11: #{tpu_custom_call.1} parent=5 // pred_region
        %s168 = ssub.s32 %s18, 1
        // Predicated region
        $region13: #{tpu_custom_call.1} parent=11 // pred_check
          %p169 = pneg %p65
        $region14: #{tpu_custom_call.1} parent=11 // pred_check_branch
          %171 = sbr.rel (%p169) target = $region16
        $region15: #{tpu_custom_call.1} parent=11 // pred_region
          %173 = vsyncadd [#allocation6], 0
          %s174 = sshll.u32 %s1, 4
          %s175 = int_to_ptr.hbm [resolvable:$true] %s174
          %s176 = sshll.u32 [#allocation5], 4
          %s177 = int_to_ptr.vmem [resolvable:$true] %s176
          %182 = dma.hbm_to_vmem [thread:$0]  %s175, 768, %s177, [#allocation6], 128, 128, 8
        $region16: #{tpu_custom_call.1} parent=11 // pred_fallthru
          _
        // Predicated region
        $region17: #{tpu_custom_call.1} parent=11 // pred_check
          %p183 = pneg %p86
        $region18: #{tpu_custom_call.1} parent=11 // pred_check_branch
          %185 = sbr.rel (%p183) target = $region20
        $region19: #{tpu_custom_call.1} parent=11 // pred_region
          _
        $region20: #{tpu_custom_call.1} parent=11 // pred_fallthru
          _
        // Predicated region
        $region21: #{tpu_custom_call.1} parent=11 // pred_check
          %p186 = pneg %p107
        $region22: #{tpu_custom_call.1} parent=11 // pred_check_branch
          %188 = sbr.rel (%p186) target = $region24
        $region23: #{tpu_custom_call.1} parent=11 // pred_region
          _
        $region24: #{tpu_custom_call.1} parent=11 // pred_fallthru
          _
        // Predicated region
        $region25: #{tpu_custom_call.1} parent=11 // pred_check
          %p189 = pneg %p128
        $region26: #{tpu_custom_call.1} parent=11 // pred_check_branch
          %191 = sbr.rel (%p189) target = $region28
        $region27: #{tpu_custom_call.1} parent=11 // pred_region
          _
        $region28: #{tpu_custom_call.1} parent=11 // pred_fallthru
          _
      $region12: #{tpu_custom_call.1} parent=5 // pred_fallthru
        _
      %p192 = scmp.lt.s32.totalorder %s18, 2
      // Predicated region
      $region29: #{tpu_custom_call.1} parent=5 // pred_check
        %p193 = pneg %p192
      $region30: #{tpu_custom_call.1} parent=5 // pred_check_branch
        %195 = sbr.rel (%p193) target = $region32
      $region31: #{tpu_custom_call.1} parent=5 // pred_region
        // Predicated region
        $region33: #{tpu_custom_call.1} parent=31 // pred_check
          %p196 = pneg %p38
        $region34: #{tpu_custom_call.1} parent=31 // pred_check_branch
          %198 = sbr.rel (%p196) target = $region36
        $region35: #{tpu_custom_call.1} parent=31 // pred_region
          %s199 = sand.u32 %s28, 1
          %s200 = scalar_lea.sflag [#allocation3], %s199
          %s201 = sand.u32 %s28, 1
          %s202 = smul.addr %s201, 16
          %s203 = scalar_lea.vmem [#allocation2], %s202
          %s204 = smul.u32 2, %s18
          %206 = vsyncadd %s200, 0
          %s207 = smul.addr %s204, 8
          %s208 = scalar_lea.hbm %s0, %s207
          %s209 = sshll.u32 %s208, 4
          %s210 = int_to_ptr.hbm [resolvable:$true] %s209
          %s211 = sshll.u32 %s203, 4
          %s212 = int_to_ptr.vmem [resolvable:$true] %s211
          %217 = dma.hbm_to_vmem [thread:$0]  %s210, 256, %s212, %s200, 128, 128, 8
        $region36: #{tpu_custom_call.1} parent=31 // pred_fallthru
          _
      $region32: #{tpu_custom_call.1} parent=5 // pred_fallthru
        _
      %p218 = scmp.le.s32.totalorder 1, %s18
      %p219 = scmp.lt.s32.totalorder %s18, 3
      %p220 = pnand %p218, %p219
      %p221 = pneg %p220
      // Predicated region
      $region37: #{tpu_custom_call.1} parent=5 // pred_check
        _
      $region38: #{tpu_custom_call.1} parent=5 // pred_check_branch
        %223 = sbr.rel (%p220) target = $region40
      $region39: #{tpu_custom_call.1} parent=5 // pred_region
        %s224 = ssub.s32 %s18, 1
        %s225 = sand.u32 %s31, 1
        %s226 = scalar_lea.sflag [#allocation3], %s225
        %s227 = sand.u32 %s31, 1
        %s228 = smul.addr %s227, 16
        %s229 = scalar_lea.vmem [#allocation2], %s228
        // Predicated region
        $region41: #{tpu_custom_call.1} parent=39 // pred_check
          %p230 = pneg %p44
        $region42: #{tpu_custom_call.1} parent=39 // pred_check_branch
          %232 = sbr.rel (%p230) target = $region44
        $region43: #{tpu_custom_call.1} parent=39 // pred_region
          %234 = dma.done %s226, 256
        $region44: #{tpu_custom_call.1} parent=39 // pred_fallthru
          _
        // Predicated region
        $region45: #{tpu_custom_call.1} parent=39 // pred_check
          %p235 = pneg %p65
        $region46: #{tpu_custom_call.1} parent=39 // pred_check_branch
          %237 = sbr.rel (%p235) target = $region48
        $region47: #{tpu_custom_call.1} parent=39 // pred_region
          %239 = dma.done [#allocation6], 768
        $region48: #{tpu_custom_call.1} parent=39 // pred_fallthru
          _
        %s240 = sand.u32 %s31, 1
        %s241 = scalar_lea.sflag [#allocation3], %s240
        %s242 = sand.u32 %s31, 1
        %s243 = smul.addr %s242, 16
        %s244 = scalar_lea.vmem [#allocation2], %s243
        %p245 = pneg %p44
        %p246 = pneg %p41
        %p247 = pneg %p65
        %p248 = pneg %p62
        %p249 = pneg %p86
        %p250 = pneg %p83
        %p251 = pneg %p107
        %p252 = pneg %p104
        %p253 = pneg %p128
        %p254 = pneg %p125
        %p255 = pneg %p154
        %p256 = pneg %p151
        %s257 = sand.u32 %s141, 1
        %s258 = scalar_lea.sflag [#allocation4], %s257
        %s259 = sand.u32 %s141, 1
        %s260 = smul.addr %s259, 16
        %s261 = scalar_lea.vmem [#allocation7], %s260
        %s262 = smul.u32 2, %s23
        %s263 = smul.u32 2, %s23
        %v264 = vld [vmem:[%s229] sm:$0xff]
        %v265 = vld [vmem:[%s229 + $0x8] sm:$0xff]
        %v266 = vld [vmem:[#allocation5] sm:$0xff]
        %v267 = vld [vmem:[#allocation5 + $0x8] sm:$0xff]
        %v268 = vld [vmem:[#allocation5 + $0x10] sm:$0xff]
        %v269 = vld [vmem:[#allocation5 + $0x18] sm:$0xff]
        %v270 = vld [vmem:[#allocation5 + $0x20] sm:$0xff]
        %v271 = vld [vmem:[#allocation5 + $0x28] sm:$0xff]
        %v272 = vld [vmem:[%s2] sm:$0x1]
        %v274 = vperm.slane %v272, 0
        %vm276 = vcmask 392192
        %v278 = vsel %vm276, %v264, 0
        %v281 = vsel %vm276, %v265, 0
        %283 = vmatpush.msra.mxu0 0.0
        %284 = vmatpush.msra.mxu0 0.0
        %285 = vmatpush.msra.mxu0 0.0
        %286 = vmatpush.msra.mxu0 0.0
        %287 = vmatpush.msra.mxu0 0.0
        %288 = vmatpush.msra.mxu0 0.0
        %289 = vmatpush.msra.mxu0 0.0
        %290 = vmatpush.msra.mxu0 0.0
        %291 = vmatpush.msra.mxu0 0.0
        %292 = vmatpush.msra.mxu0 0.0
        %293 = vmatpush.msra.mxu0 %v271
        %294 = vmatpush.msra.mxu0 %v270
        %295 = vmatpush.msra.mxu0 %v269
        %296 = vmatpush.msra.mxu0 %v268
        %297 = vmatpush.msra.mxu0 %v267
        %298 = vmatpush.msra.mxu0 %v266
        %299 = vmatmul.f32.gmra.mxu0 %v278
        %v300 = vpop.f32.mrf.mxu0
        %v301 = vadd.f32 %v274, %v300
        %302 = vmatmul.f32.gmra.mxu0 %v281
        %v303 = vpop.f32.mrf.mxu0
        %v304 = vadd.f32 %v274, %v303
        %305 = vdwg.mxu0
        %vm306 = vcmask 785408
        %v307 = vsel %vm306, %v301, 0.0
        %308 = vadd.xlane.f32.xlu0 %v307
        %v309 = vpop.xlane.xlu0 %308
        %v310 = vsel %vm306, %v304, 0.0
        %311 = vadd.xlane.f32.xlu0 %v310
        %v312 = vpop.xlane.xlu0 %311
        %v313 = vrcp.pop 96.0
        %v314 = vmul.f32 96.0, %v313
        %v315 = vsub.f32 1.0, %v314
        %v316 = vmul.f32 %v313, %v315
        %v317 = vadd.f32 %v313, %v316
        %vm318 = vweird.f32 %v313
        %v319 = vsel %vm318, %v313, %v317
        %v320 = vmul.f32 %v309, %v319
        %v321 = vmul.f32 %v312, %v319
        %v322 = vsub.f32 %v301, %v320
        %v323 = vsub.f32 %v304, %v321
        %v324 = vmul.f32 %v322, %v322
        %v325 = vmul.f32 %v323, %v323
        %v326 = vsel %vm306, %v324, 0.0
        %327 = vadd.xlane.f32.xlu0 %v326
        %v328 = vpop.xlane.xlu0 %327
        %v329 = vsel %vm306, %v325, 0.0
        %330 = vadd.xlane.f32.xlu0 %v329
        %v331 = vpop.xlane.xlu0 %330
        %v332 = vmul.f32 %v328, %v319
        %v333 = vmul.f32 %v331, %v319
        %v334 = vadd.f32 %v332, 1e-05
        %v335 = vadd.f32 %v333, 1e-05
        %v336 = vrsqrt.pop %v334
        %v337 = vmul.f32 %v336, %v334
        %v338 = vmul.f32 %v337, %v336
        %v339 = vmul.f32 0.5, %v338
        %v340 = vsub.f32 1.5, %v339
        %v341 = vmul.f32 %v336, %v340
        %vm342 = vweird.f32 %v334
        %vm343 = vweird.f32 %v336
        %vm344 = vmor %vm342, %vm343
        %v345 = vsel %vm344, %v336, %v341
        %v346 = vrsqrt.pop %v335
        %v347 = vmul.f32 %v346, %v335
        %v348 = vmul.f32 %v347, %v346
        %v349 = vmul.f32 0.5, %v348
        %v350 = vsub.f32 1.5, %v349
        %v351 = vmul.f32 %v346, %v350
        %vm352 = vweird.f32 %v335
        %vm353 = vweird.f32 %v346
        %vm354 = vmor %vm352, %vm353
        %v355 = vsel %vm354, %v346, %v351
        %v356 = vmul.f32 %v322, %v345
        %v357 = vmul.f32 %v323, %v355
        %v358 = vld [vmem:[%s3] sm:$0x1]
        %v360 = vperm.slane %v358, 0
        %v362 = vmul.f32 %v356, %v360
        %v363 = vmul.f32 %v357, %v360
        %v364 = vld [vmem:[%s4] sm:$0x1]
        %v366 = vperm.slane %v364, 0
        %v368 = vadd.f32 %v362, %v366
        %v369 = vadd.f32 %v363, %v366
        %370 = vst.msk [vmem:[%s261] sm:$0xff] %vm306, %v368
        %371 = vst.msk [vmem:[%s261 + $0x8] sm:$0xff] %vm306, %v369
        %s372 = sand.u32 %s141, 1
        %s373 = scalar_lea.sflag [#allocation4], %s372
        %s374 = sand.u32 %s141, 1
        %s375 = smul.addr %s374, 16
        %s376 = scalar_lea.vmem [#allocation7], %s375
        // Predicated region
        $region49: #{tpu_custom_call.1} parent=39 // pred_check
          %p377 = pneg %p151
        $region50: #{tpu_custom_call.1} parent=39 // pred_check_branch
          %379 = sbr.rel (%p377) target = $region52
        $region51: #{tpu_custom_call.1} parent=39 // pred_region
          %s380 = smul.u32 2, %s23
          %382 = vsyncadd %s373, 0
          %s383 = smul.addr %s380, 8
          %s384 = scalar_lea.hbm %s5, %s383
          %s385 = sshll.u32 %s376, 4
          %s386 = int_to_ptr.vmem [resolvable:$true] %s385
          %s387 = sshll.u32 %s384, 4
          %s388 = int_to_ptr.hbm [resolvable:$true] %s387
          %393 = dma.vmem_to_hbm [thread:$0]  %s386, 256, %s388, %s373, 128, 128, 8
        $region52: #{tpu_custom_call.1} parent=39 // pred_fallthru
          _
      $region40: #{tpu_custom_call.1} parent=5 // pred_fallthru
        _
      %p394 = scmp.le.s32.totalorder 2, %s18
      // Predicated region
      $region53: #{tpu_custom_call.1} parent=5 // pred_check
        %p395 = pneg %p394
      $region54: #{tpu_custom_call.1} parent=5 // pred_check_branch
        %397 = sbr.rel (%p395) target = $region56
      $region55: #{tpu_custom_call.1} parent=5 // pred_region
        %s398 = ssub.s32 %s18, 2
        // Predicated region
        $region57: #{tpu_custom_call.1} parent=55 // pred_check
          %p399 = pneg %p157
        $region58: #{tpu_custom_call.1} parent=55 // pred_check_branch
          %401 = sbr.rel (%p399) target = $region60
        $region59: #{tpu_custom_call.1} parent=55 // pred_region
          %s402 = sand.u32 %s142, 1
          %s403 = scalar_lea.sflag [#allocation4], %s402
          %s404 = sand.u32 %s142, 1
          %s405 = smul.addr %s404, 16
          %s406 = scalar_lea.vmem [#allocation7], %s405
          %408 = dma.done %s403, 256
        $region60: #{tpu_custom_call.1} parent=55 // pred_fallthru
          _
      $region56: #{tpu_custom_call.1} parent=5 // pred_fallthru
        _
    $region6: #{tpu_custom_call.1} parent=1 // loop_footer
      %s22 = sadd.s32 1, %s18
    $region7: #{tpu_custom_call.1} parent=1 // loop_footer_branch
      %17 = sbr.rel target = $region3
    $region8: #{tpu_custom_call.1} parent=1 // loop_exit
      _
    %409 = vsyncpa [#allocation3], 1
    %s410 = scalar_lea.sflag [#allocation3], 1
    %411 = vsyncpa %s410, 1
    %412 = vsyncpa [#allocation6], 1
    %413 = vsyncpa [#allocation4], 1
    %s414 = scalar_lea.sflag [#allocation4], 1
    %415 = vsyncpa %s414, 1

</llo_original>
